<compile_context>
chip_gen: v5e
topology: v5e:2x2
jax: 0.10.0
libtpu: 0.0.40
codegen_flags: <defaults>
</compile_context>

<pallas_src>
import functools
import numpy as np
import jax
import jax.numpy as jnp
from jax.experimental import pallas as pl
from jax.experimental.pallas import tpu as pltpu

BN_EPS = 1e-3  # OpenCOOD BatchNorm(eps=1e-3); eval-mode fold.

# ----------------------------- configuration --------------------------------
VOXEL_SIZE = (2.0, 2.0, 4.0)
PC_RANGE = (-16.0, -16.0, -3.0, 16.0, 16.0, 1.0)
NX, NY = 16, 16                       # BEV grid (W0=NX, H0=NY)
PFN_OUT = 64
LAYER_NUMS = (1, 1)
LAYER_STRIDES = (2, 2)
NUM_FILTERS = (64, 128)
UPSAMPLE_STRIDES = (1, 2)
NUM_UPSAMPLE_FILTERS = (128, 128)
OUT_CHANNEL = sum(NUM_UPSAMPLE_FILTERS)   # 256 -> matches NaiveCompressor(256, ...)
ANCHOR_NUM = 2
COMPRESS_RATIO = 2


def _ceil_to(x, m):
    return (x + m - 1) // m * m


# ============================= Pallas kernels =================================
# ---- fused conv (k*k taps accumulated in-kernel, bf16 MXU, BN-shift epilogue) ----
def _conv_tap_kernel(x_ref, w_ref, b_ref, o_ref, xp_ref, *,
                     k, pad_t, pad_l, relu, needs_pad):
    # x_ref : (1, H, W, Cin)   bf16   (one agent / batch element)
    # w_ref : (k*k, Cin, Cout) bf16   (BN scale already folded in)
    # b_ref : (1, Cout)        f32    (folded BN shift / bias)
    # o_ref : (1, Ho, Wo, Cout)
    # xp_ref: (Hp, Wp, Cin)    f32    VMEM scratch holding the zero-padded map
    _, H, W, Cin = x_ref.shape
    _, Ho, Wo, Cout = o_ref.shape

    if needs_pad:
        xp_ref[...] = jnp.zeros(xp_ref.shape, xp_ref.dtype)
    xp_ref[pad_t:pad_t + H, pad_l:pad_l + W, :] = x_ref[0].astype(jnp.float32)

    acc = jnp.zeros((Ho * Wo, Cout), jnp.float32)
    for di in range(k):
        for dj in range(k):
            xt = xp_ref[di:di + Ho, dj:dj + Wo, :]                 # (Ho, Wo, Cin) f32
            xt = xt.reshape(Ho * Wo, Cin).astype(jnp.bfloat16)
            acc = acc + jnp.dot(xt, w_ref[di * k + dj],
                                preferred_element_type=jnp.float32)
    y = acc + b_ref[...]
    if relu:
        y = jnp.maximum(y, 0.0)
    o_ref[...] = y.reshape(1, Ho, Wo, Cout).astype(o_ref.dtype)


def _conv_core(x, wk, shift, *, k, pads, relu, out_dtype=jnp.bfloat16):
    """Stride-1 'valid' conv over a zero-padded map: x (N,H,W,Cin), wk (k*k,Cin,Cout)."""
    pad_t, pad_b, pad_l, pad_r = pads
    N, H, W, Cin = x.shape
    Cout = wk.shape[-1]
    Hp, Wp = H + pad_t + pad_b, W + pad_l + pad_r
    Ho, Wo = Hp - k + 1, Wp - k + 1

    x = x.astype(jnp.bfloat16)
    wk = wk.astype(jnp.bfloat16)
    shift = shift.astype(jnp.float32).reshape(1, Cout)

    kern = functools.partial(
        _conv_tap_kernel, k=k, pad_t=pad_t, pad_l=pad_l, relu=relu,
        needs_pad=(pad_t + pad_b + pad_l + pad_r) > 0)

    return pl.pallas_call(
        kern,
        out_shape=jax.ShapeDtypeStruct((N, Ho, Wo, Cout), out_dtype),
        grid_spec=pltpu.PrefetchScalarGridSpec(
            num_scalar_prefetch=0,
            grid=(N,),
            in_specs=[
                pl.BlockSpec((1, H, W, Cin), lambda n: (n, 0, 0, 0)),
                pl.BlockSpec((k * k, Cin, Cout), lambda n: (0, 0, 0)),
                pl.BlockSpec((1, Cout), lambda n: (0, 0)),
            ],
            out_specs=pl.BlockSpec((1, Ho, Wo, Cout), lambda n: (n, 0, 0, 0)),
            scratch_shapes=[pltpu.VMEM((Hp, Wp, Cin), jnp.float32)],
        ),
        compiler_params=pltpu.CompilerParams(dimension_semantics=("parallel",)),
    )(x, wk, shift)


# ---- fused PFN: Linear + BN + ReLU + pillar max (no HBM intermediate) ----
def _pfn_kernel(x_ref, w_ref, b_ref, o_ref):
    # x_ref: (tm, P, K) f32 ; w_ref: (K, C) f32 ; b_ref: (1, C) f32 ; o_ref: (tm, C)
    tm, P, K = x_ref.shape
    C = o_ref.shape[-1]
    y = jnp.dot(x_ref[...].reshape(tm * P, K), w_ref[...],
                preferred_element_type=jnp.float32)
    y = jnp.maximum(y + b_ref[...], 0.0)
    o_ref[...] = jnp.max(y.reshape(tm, P, C), axis=1).astype(o_ref.dtype)


def pfn_fused(feats, w, bn):
    """feats (M, P, 10) f32 (already masked) -> pillar features (M, 64) bf16."""
    M, P, K = feats.shape
    C = w.shape[1]
    scale, shift = fold_bn(bn)
    wb = (w * scale[None, :]).astype(jnp.float32)

    tm = min(_ceil_to(M, 8), 512)
    Mp = _ceil_to(M, tm)
    x = feats
    if Mp != M:
        x = jnp.pad(x, ((0, Mp - M), (0, 0), (0, 0)))

    out = pl.pallas_call(
        _pfn_kernel,
        out_shape=jax.ShapeDtypeStruct((Mp, C), jnp.bfloat16),
        grid_spec=pltpu.PrefetchScalarGridSpec(
            num_scalar_prefetch=0,
            grid=(Mp // tm,),
            in_specs=[
                pl.BlockSpec((tm, P, K), lambda i: (i, 0, 0)),
                pl.BlockSpec((K, C), lambda i: (0, 0)),
                pl.BlockSpec((1, C), lambda i: (0, 0)),
            ],
            out_specs=pl.BlockSpec((tm, C), lambda i: (i, 0)),
        ),
        compiler_params=pltpu.CompilerParams(dimension_semantics=("parallel",)),
    )(x, wb, shift.reshape(1, C).astype(jnp.float32))
    return out[:M]


# ---- MaxFusion: single segment-max kernel per scale (scalar-prefetch offsets) ----
def _seg_max_kernel(off_ref, cnt_ref, x_ref, o_ref, acc_ref):
    a = pl.program_id(1)

    @pl.when(a == 0)
    def _init():
        acc_ref[...] = x_ref[...]

    @pl.when(a > 0)
    def _acc():
        acc_ref[...] = jnp.maximum(acc_ref[...], x_ref[...])

    @pl.when(a == pl.num_programs(1) - 1)
    def _store():
        o_ref[...] = acc_ref[...]


def max_fusion(x, record_len, normalized_affine_matrix=None):
    # TODO(synk): warp_affine_simple (affine_grid + bilinear grid_sample) has no clean
    # Pallas equivalent here; with identity pairwise transforms the warp is identity.
    Nag, H, W, C = x.shape
    B = len(record_len)
    max_n = int(max(record_len))
    offs = np.zeros((B,), np.int32)
    if B > 1:
        offs[1:] = np.cumsum(np.asarray(record_len[:-1], np.int64)).astype(np.int32)
    cnts = np.asarray(record_len, np.int32)

    WC = W * C
    xr = x.reshape(Nag, H, WC)                       # lane-dense (W*C) blocks

    out = pl.pallas_call(
        _seg_max_kernel,
        out_shape=jax.ShapeDtypeStruct((B, H, WC), x.dtype),
        grid_spec=pltpu.PrefetchScalarGridSpec(
            num_scalar_prefetch=2,
            grid=(B, max_n),
            in_specs=[pl.BlockSpec(
                (1, H, WC),
                lambda b, a, off, cnt: (off[b] + jnp.minimum(a, cnt[b] - 1), 0, 0))],
            out_specs=pl.BlockSpec((1, H, WC), lambda b, a, off, cnt: (b, 0, 0)),
            scratch_shapes=[pltpu.VMEM((1, H, WC), x.dtype)],
        ),
        compiler_params=pltpu.CompilerParams(
            dimension_semantics=("parallel", "arbitrary")),
    )(jnp.asarray(offs), jnp.asarray(cnts), xr)
    return out.reshape(B, H, W, C)


# ----------------------------- conv / deconv glue -----------------------------
def fold_bn(bn):
    scale = bn['gamma'] / jnp.sqrt(bn['var'] + BN_EPS)
    shift = bn['beta'] - bn['mean'] * scale
    return scale, shift


def _space_to_depth2(x):
    N, H, W, C = x.shape
    x = x.reshape(N, H // 2, 2, W // 2, 2, C)
    x = jnp.transpose(x, (0, 1, 3, 2, 4, 5))
    return x.reshape(N, H // 2, W // 2, 4 * C)


def _s2d_weight(w):
    """3x3 / stride-2 / pad-1 conv weight -> equivalent 2x2 taps over space-to-depth input."""
    cout, cin = w.shape[0], w.shape[1]
    wt = jnp.transpose(w, (2, 3, 1, 0))                      # (3, 3, Cin, Cout)
    w2 = jnp.zeros((2, 2, 2, 2, cin, cout), w.dtype)          # (ta, tb, rb, cb, Cin, Cout)
    for ta in range(2):
        for rb in range(2):
            a = 2 * ta + rb - 1
            if a < 0 or a > 2:
                continue
            for tb in range(2):
                for cb in range(2):
                    b = 2 * tb + cb - 1
                    if b < 0 or b > 2:
                        continue
                    w2 = w2.at[ta, tb, rb, cb].set(wt[a, b])
    return w2.reshape(4, 4 * cin, cout)


def conv_bn_relu(x, w, bn, stride=1, relu=True):
    # w: PyTorch layout [Cout, Cin, k, k], conv has bias=False, BN folded (scale into W).
    cout, cin, k, _ = w.shape
    scale, shift = fold_bn(bn)
    wf = w * scale[:, None, None, None]
    if stride == 2:
        assert k == 3
        x = _space_to_depth2(x)
        wk = _s2d_weight(wf)
        k_eff, pads = 2, (1, 0, 1, 0)          # pad top/left only on the s2d grid
    else:
        assert stride == 1
        wk = jnp.transpose(wf, (2, 3, 1, 0)).reshape(k * k, cin, cout)
        p = (k - 1) // 2
        k_eff, pads = k, (p, p, p, p)
    return _conv_core(x, wk, shift, k=k_eff, pads=pads, relu=relu,
                      out_dtype=jnp.bfloat16)


def deconv_bn_relu(x, w, bn, k):
    # ConvTranspose2d(kernel_size=k, stride=k, bias=False); w layout [Cin, Cout, k, k]
    if k == 1:
        w_c = jnp.transpose(w, (1, 0, 2, 3))          # -> conv1x1 weight [Cout, Cin, 1, 1]
        return conv_bn_relu(x, w_c, bn, stride=1, relu=True)
    cin, cout = w.shape[0], w.shape[1]
    scale, shift = fold_bn(bn)
    wt = jnp.transpose(w, (0, 2, 3, 1)).reshape(cin, k * k * cout)
    wt = wt * jnp.tile(scale, k * k)[None, :]
    shift_full = jnp.tile(shift, k * k)
    y = _conv_core(x, wt.reshape(1, cin, k * k * cout), shift_full,
                   k=1, pads=(0, 0, 0, 0), relu=True, out_dtype=jnp.bfloat16)
    # TODO(synk): the kxk depth-to-space interleave stays as (tiny) JAX glue instead of
    # an in-kernel output scatter.
    N, H, W, _ = y.shape
    y = y.reshape(N, H, W, k, k, cout)
    y = jnp.transpose(y, (0, 1, 3, 2, 4, 5)).reshape(N, H * k, W * k, cout)
    return y


def det_heads(x, cls_w, cls_b, reg_w, reg_b):
    """Fused cls/reg 1x1 heads: one GEMM, output padded to 128 lanes (lane-dense store)."""
    cin = x.shape[-1]
    n_cls, n_reg = cls_w.shape[0], reg_w.shape[0]
    n_real = n_cls + n_reg
    n_pad = 128
    wk = jnp.transpose(jnp.concatenate([cls_w, reg_w], axis=0)[:, :, 0, 0])    # (cin, 16)
    wk = jnp.pad(wk, ((0, 0), (0, n_pad - n_real))).reshape(1, cin, n_pad)
    bias = jnp.pad(jnp.concatenate([cls_b, reg_b], axis=0), (0, n_pad - n_real))
    y = _conv_core(x, wk, bias, k=1, pads=(0, 0, 0, 0), relu=False,
                   out_dtype=jnp.float32)
    return y[..., :n_cls], y[..., n_cls:n_real]


# ----------------------------- model pieces ----------------------------------
def normalize_pairwise_tfm(pairwise_t_matrix, H, W, discrete_ratio, downsample_rate=1):
    m = pairwise_t_matrix[:, :, :, jnp.array([0, 1]), :][:, :, :, :, jnp.array([0, 1, 3])]
    m = m.at[..., 0, 1].multiply(H / W)
    m = m.at[..., 1, 0].multiply(W / H)
    m = m.at[..., 0, 2].set(m[..., 0, 2] / (downsample_rate * discrete_ratio * W) * 2)
    m = m.at[..., 1, 2].set(m[..., 1, 2] / (downsample_rate * discrete_ratio * H) * 2)
    return m


def naive_compressor(x, p):
    # NaiveCompressor: conv3x3 (C -> C/ratio) + conv3x3 (C/ratio -> C) + conv3x3 (C -> C)
    x = conv_bn_relu(x, p['enc']['w'], p['enc']['bn'])
    x = conv_bn_relu(x, p['dec1']['w'], p['dec1']['bn'])
    x = conv_bn_relu(x, p['dec2']['w'], p['dec2']['bn'])
    return x


def init_params(key):
    keys = iter(jax.random.split(key, 64))

    def conv_w(cout, cin, k):
        return jax.random.normal(next(keys), (cout, cin, k, k), jnp.float32) / np.sqrt(cin * k * k)

    def deconv_w(cin, cout, k):
        return jax.random.normal(next(keys), (cin, cout, k, k), jnp.float32) / np.sqrt(cin * k * k)

    def bn(c):
        return dict(
            gamma=1.0 + 0.1 * jax.random.normal(next(keys), (c,), jnp.float32),
            beta=0.1 * jax.random.normal(next(keys), (c,), jnp.float32),
            mean=jnp.zeros((c,), jnp.float32),
            var=jnp.ones((c,), jnp.float32),
        )

    params = {}
    # PillarVFE: single PFN layer = Linear(10 -> 64, bias=False) + BatchNorm1d(64) + ReLU + max
    params['pfn_w'] = jax.random.normal(next(keys), (10, PFN_OUT), jnp.float32) / np.sqrt(10)
    params['pfn_bn'] = bn(PFN_OUT)

    # BaseBEVBackbone blocks (ZeroPad+Conv(stride)+BN+ReLU, then layer_nums convs)
    blocks, c_prev = [], PFN_OUT
    for n_layer, stride, c_out in zip(LAYER_NUMS, LAYER_STRIDES, NUM_FILTERS):
        convs = [dict(w=conv_w(c_out, c_prev, 3), bn=bn(c_out))]
        for _ in range(n_layer):
            convs.append(dict(w=conv_w(c_out, c_out, 3), bn=bn(c_out)))
        blocks.append(dict(convs=convs, stride=stride))
        c_prev = c_out
    params['blocks'] = blocks

    # deblocks: ConvTranspose2d(kernel=stride=u) + BN + ReLU
    deblocks = []
    for cin, cup, u in zip(NUM_FILTERS, NUM_UPSAMPLE_FILTERS, UPSAMPLE_STRIDES):
        deblocks.append(dict(w=deconv_w(cin, cup, u), bn=bn(cup), k=u))
    params['deblocks'] = deblocks

    def compressor(cdim, ratio):
        ch = cdim // ratio
        return dict(enc=dict(w=conv_w(ch, cdim, 3), bn=bn(ch)),
                    dec1=dict(w=conv_w(cdim, ch, 3), bn=bn(cdim)),
                    dec2=dict(w=conv_w(cdim, cdim, 3), bn=bn(cdim)))

    params['compressor'] = compressor(OUT_CHANNEL, COMPRESS_RATIO)
    # TODO(synk): exact NaiveReCompressor architecture is not in the provided source;
    # mirrored as a NaiveCompressor-style conv encoder/decoder.
    params['re_compressor'] = compressor(OUT_CHANNEL, COMPRESS_RATIO)

    params['cls_w'] = conv_w(ANCHOR_NUM, OUT_CHANNEL, 1)
    params['cls_b'] = 0.1 * jax.random.normal(next(keys), (ANCHOR_NUM,), jnp.float32)
    params['reg_w'] = conv_w(7 * ANCHOR_NUM, OUT_CHANNEL, 1)
    params['reg_b'] = 0.1 * jax.random.normal(next(keys), (7 * ANCHOR_NUM,), jnp.float32)
    return params


def point_pillar_forward(params, data_dict):
    voxel_features = data_dict['voxel_features']       # [M, P, 4]
    voxel_coords = data_dict['voxel_coords']            # [M, 4] = (batch, z, y, x)
    voxel_num_points = data_dict['voxel_num_points']    # [M]
    record_len = data_dict['record_len']                 # python list of ints
    pairwise_t_matrix = data_dict['pairwise_t_matrix']   # [B, L, L, 4, 4]

    M, P, _ = voxel_features.shape
    vx, vy, vz = VOXEL_SIZE
    x_off = vx / 2 + PC_RANGE[0]
    y_off = vy / 2 + PC_RANGE[1]
    z_off = vz / 2 + PC_RANGE[2]

    # ---- PillarVFE feature augmentation (glue) ----
    num = jnp.maximum(voxel_num_points.astype(jnp.float32), 1.0)
    points_mean = voxel_features[:, :, :3].sum(axis=1, keepdims=True) / num[:, None, None]
    f_cluster = voxel_features[:, :, :3] - points_mean
    coords_f = voxel_coords.astype(jnp.float32)
    f_center = jnp.stack([
        voxel_features[:, :, 0] - (coords_f[:, 3:4] * vx + x_off),
        voxel_features[:, :, 1] - (coords_f[:, 2:3] * vy + y_off),
        voxel_features[:, :, 2] - (coords_f[:, 1:2] * vz + z_off)], axis=-1)
    feats = jnp.concatenate([voxel_features, f_cluster, f_center], axis=-1)   # [M, P, 10]
    mask = (jnp.arange(P)[None, :] < voxel_num_points[:, None]).astype(jnp.float32)
    feats = feats * mask[:, :, None]

    # ---- fused PFN (Linear + BN + ReLU + pillar max in one kernel) ----
    pillar_feat = pfn_fused(feats, params['pfn_w'], params['pfn_bn'])         # [M, 64] bf16

    # ---- PointPillarScatter (data-dependent scatter: plain JAX glue) ----
    n_agents = int(sum(record_len))
    canvas = jnp.zeros((n_agents, NY, NX, PFN_OUT), jnp.bfloat16)
    canvas = canvas.at[voxel_coords[:, 0], voxel_coords[:, 2], voxel_coords[:, 3]].set(pillar_feat)
    spatial_features = canvas                          # NHWC  ==  PyTorch [N, 64, NY, NX]

    H0, W0 = NY, NX
    normalized_affine_matrix = normalize_pairwise_tfm(pairwise_t_matrix, H0, W0, VOXEL_SIZE[0])

    # ---- backbone.get_multiscale_feature ----
    feature_list, x = [], spatial_features
    for blk in params['blocks']:
        x = conv_bn_relu(x, blk['convs'][0]['w'], blk['convs'][0]['bn'], stride=blk['stride'])
        for c in blk['convs'][1:]:
            x = conv_bn_relu(x, c['w'], c['bn'], stride=1)
        feature_list.append(x)

    # ---- per-scale MaxFusion (segment max across agents, one kernel per scale) ----
    fused_feature_list = [max_fusion(f, record_len, normalized_affine_matrix)
                          for f in feature_list]

    # ---- backbone.decode_multiscale_feature (deconv + concat) ----
    ups = [deconv_bn_relu(f, d['w'], d['bn'], d['k'])
           for f, d in zip(fused_feature_list, params['deblocks'])]
    fused_feature = jnp.concatenate(ups, axis=-1)      # [B, H0/2, W0/2, 256]

    # ---- train_mode == 'coalign' branch (compression=True) ----
    copy_fused_feature = naive_compressor(fused_feature, params['compressor'])
    fused_feature_diff = naive_compressor(copy_fused_feature, params['re_compressor'])

    psm, rm = det_heads(fused_feature, params['cls_w'], params['cls_b'],
                        params['reg_w'], params['reg_b'])

    def to_nchw(z):
        return jnp.transpose(z.astype(jnp.float32), (0, 3, 1, 2))

    # TODO(synk): DifussionFusion / AttFusion / ScaledDotProductAttention / dir_head are
    # constructed in __init__ but not exercised by this (coalign, max-fusion) forward path.
    return {
        'cls_preds': to_nchw(psm),
        'reg_preds': to_nchw(rm),
        'feature': to_nchw(fused_feature),
        'diff_feature': to_nchw(fused_feature_diff),
    }


# ----------------------------- main -------------------------------------------
if __name__ == "__main__":
    key = jax.random.PRNGKey(0)
    pkey, dkey = jax.random.split(key)
    params = init_params(pkey)

    # synthetic voxelized point cloud: 1 sample, 2 agents, 16 pillars/agent, 8 pts/pillar
    M, P = 32, 8
    record_len = [2]
    k1, k2, k3, k4 = jax.random.split(dkey, 4)
    cells = jax.random.permutation(k1, NY * NX)[:M]            # unique BEV cells
    ys, xs = cells // NX, cells % NX
    batch_idx = jnp.concatenate([jnp.zeros(M // 2, jnp.int32), jnp.ones(M // 2, jnp.int32)])
    voxel_coords = jnp.stack([batch_idx, jnp.zeros(M, jnp.int32),
                              ys.astype(jnp.int32), xs.astype(jnp.int32)], axis=1)
    voxel_num_points = jax.random.randint(k2, (M,), 1, P + 1)
    pts_xyz = jax.random.uniform(k3, (M, P, 3), minval=-1.0, maxval=1.0)
    centers = jnp.stack([
        voxel_coords[:, 3].astype(jnp.float32) * VOXEL_SIZE[0] + VOXEL_SIZE[0] / 2 + PC_RANGE[0],
        voxel_coords[:, 2].astype(jnp.float32) * VOXEL_SIZE[1] + VOXEL_SIZE[1] / 2 + PC_RANGE[1],
        jnp.full((M,), -1.0)], axis=1)
    pts_xyz = pts_xyz + centers[:, None, :]
    intensity = jax.random.uniform(k4, (M, P, 1))
    voxel_features = jnp.concatenate([pts_xyz, intensity], axis=-1)
    pmask = (jnp.arange(P)[None, :] < voxel_num_points[:, None]).astype(jnp.float32)
    voxel_features = voxel_features * pmask[:, :, None]        # padded points are zero

    pairwise_t_matrix = jnp.tile(jnp.eye(4, dtype=jnp.float32)[None, None, None], (1, 2, 2, 1, 1))

    data = dict(voxel_features=voxel_features,
                voxel_coords=voxel_coords,
                voxel_num_points=voxel_num_points,
                record_len=record_len,
                pairwise_t_matrix=pairwise_t_matrix)

    out = point_pillar_forward(params, data)
    jax.block_until_ready(out)
    assert out['cls_preds'].shape == (1, ANCHOR_NUM, NY // 2, NX // 2)
    assert out['reg_preds'].shape == (1, 7 * ANCHOR_NUM, NY // 2, NX // 2)
    assert out['feature'].shape == (1, OUT_CHANNEL, NY // 2, NX // 2)
    assert out['diff_feature'].shape == (1, OUT_CHANNEL, NY // 2, NX // 2)
    print("KERNEL_OK")
</pallas_src>

<mosaic_0001>
module attributes {stable_mosaic.version = 11 : i64} {
  func.func @_pfn_kernel(%arg0: i32, %arg1: memref<32x8x10xf32, #tpu.memory_space<vmem>>, %arg2: memref<10x64xf32, #tpu.memory_space<vmem>>, %arg3: memref<1x64xf32, #tpu.memory_space<vmem>>, %arg4: memref<32x64xbf16, #tpu.memory_space<vmem>>) attributes {dimension_semantics = [#tpu.dimension_semantics<parallel>], iteration_bounds = array<i64: 1>, scalar_prefetch = 0 : i64, scratch_operands = 0 : i64, tpu.core_type = #tpu.core_type<tc>, window_params = [{transform_indices = @transform_0, window_bounds = array<i64: 32, 8, 10>}, {pipeline_mode = #tpu.pipeline_mode<synchronous>, transform_indices = @transform_1, window_bounds = array<i64: 10, 64>}, {pipeline_mode = #tpu.pipeline_mode<synchronous>, transform_indices = @transform_2, window_bounds = array<i64: 1, 64>}, {transform_indices = @transform_3, window_bounds = array<i64: 32, 64>}]} {
    %c0 = arith.constant 0 : index
    %c0_0 = arith.constant 0 : index
    %c0_1 = arith.constant 0 : index
    %0 = vector.load %arg1[%c0, %c0_0, %c0_1] : memref<32x8x10xf32, #tpu.memory_space<vmem>>, vector<32x8x10xf32>
    %1 = vector.shape_cast %0 : vector<32x8x10xf32> to vector<256x10xf32>
    %c0_2 = arith.constant 0 : index
    %c0_3 = arith.constant 0 : index
    %2 = vector.load %arg2[%c0_2, %c0_3] : memref<10x64xf32, #tpu.memory_space<vmem>>, vector<10x64xf32>
    %cst = arith.constant dense<0.000000e+00> : vector<256x64xf32>
    %3 = tpu.matmul %1, %2, %cst {dimension_numbers = #tpu.dot_dimension_numbers<[1], [0], [0], [1], [0, 0, 1, 1], [], []>} : vector<256x10xf32>, vector<10x64xf32>, vector<256x64xf32> -> vector<256x64xf32>
    %c0_4 = arith.constant 0 : index
    %c0_5 = arith.constant 0 : index
    %4 = vector.load %arg3[%c0_4, %c0_5] : memref<1x64xf32, #tpu.memory_space<vmem>>, vector<1x64xf32>
    %5 = vector.broadcast %4 : vector<1x64xf32> to vector<256x64xf32>
    %6 = arith.addf %3, %5 : vector<256x64xf32>
    %cst_6 = arith.constant 0.000000e+00 : f32
    %7 = vector.broadcast %cst_6 : f32 to vector<256x64xf32>
    %8 = arith.maximumf %6, %7 : vector<256x64xf32>
    %9 = vector.shape_cast %8 : vector<256x64xf32> to vector<32x8x64xf32>
    %cst_7 = arith.constant dense<0xFF800000> : vector<32x64xf32>
    %10 = vector.multi_reduction <maximumf>, %9, %cst_7 [1] : vector<32x8x64xf32> to vector<32x64xf32>
    %11 = arith.truncf %10 : vector<32x64xf32> to vector<32x64xbf16>
    %c0_8 = arith.constant 0 : index
    %c0_9 = arith.constant 0 : index
    %12 = vector.load %arg4[%c0_8, %c0_9] : memref<32x64xbf16, #tpu.memory_space<vmem>>, vector<32x64xbf16>
    tpu.vector_store %arg4[%c0_8, %c0_9], %11 {strides = array<i32>} : memref<32x64xbf16, #tpu.memory_space<vmem>>, vector<32x64xbf16>,
    return
  }
  func.func @transform_0(%arg0: i32) -> (i32, i32, i32) {
    %c0_i32 = arith.constant 0 : i32
    %c0_i32_0 = arith.constant 0 : i32
    %c0_i32_1 = arith.constant 0 : i32
    return %arg0, %c0_i32, %c0_i32_0 : i32, i32, i32
  }
  func.func @transform_1(%arg0: i32) -> (i32, i32) {
    %c0_i32 = arith.constant 0 : i32
    %c0_i32_0 = arith.constant 0 : i32
    %c0_i32_1 = arith.constant 0 : i32
    return %c0_i32, %c0_i32_0 : i32, i32
  }
  func.func @transform_2(%arg0: i32) -> (i32, i32) {
    %c0_i32 = arith.constant 0 : i32
    %c0_i32_0 = arith.constant 0 : i32
    %c0_i32_1 = arith.constant 0 : i32
    return %c0_i32, %c0_i32_0 : i32, i32
  }
  func.func @transform_3(%arg0: i32) -> (i32, i32) {
    %c0_i32 = arith.constant 0 : i32
    %c0_i32_0 = arith.constant 0 : i32
    return %arg0, %c0_i32 : i32, i32
  }
}

</mosaic_0001>

<llo_original>
// kernel: tpu_custom_call.1
$region0: #{tpu_custom_call.1}
  #allocation0 [shape = 'u32[]', space=smem, size = 0x4, offset = 0x4, fixed_abs, tag = 'smem constant byte address 0x4 - core index']
  #allocation1 [shape = 'u32[72,128]{1,0:T(1,128)}', space=vmem, size = 0x9000, scoped, tag = 'internal scratch']
  %s0 = inlined_call_operand.vmem [shape: f32[32,8,10], index: 0, kind: input, shape index: {}]
  %s1 = inlined_call_operand.vmem [shape: f32[10,64], index: 1, kind: input, shape index: {}]
  %s2 = inlined_call_operand.vmem [shape: f32[1,64], index: 2, kind: input, shape index: {}]
  %s3 = inlined_call_operand.hbm [shape: bf16[32,64], index: 3, kind: output, shape index: {}]
  %s4 = sld [smem:[#allocation0]]
  $region22: #{tpu_custom_call.1} parent=0
    _
  %s6 = ssub.s32 1, %s4
  %s7 = scalar_select 0, %s6, %s4
  $region1: #{tpu_custom_call.1} parent=0
    #allocation2 [shape = 'u8[8192]{0}', space=vmem, size = 0x2000, scoped, tag = 'output window, operand 0, single buffered']
    #allocation3 [shape = 's32[1]{0}', space=sflag, size = 0x4, scoped, tag = 'scoped memory for tpu_custom_call.1']
    %8 = vsyncpa [#allocation3], 0
    // Predicated region
    $region2: #{tpu_custom_call.1} parent=1 // pred_check
      _
    $region3: #{tpu_custom_call.1} parent=1 // pred_check_branch
      %10 = sbr.rel (0) target = $region5
    $region4: #{tpu_custom_call.1} parent=1 // pred_region
      _
    $region5: #{tpu_custom_call.1} parent=1 // pred_fallthru
      _
    // Predicated region
    $region6: #{tpu_custom_call.1} parent=1 // pred_check
      _
    $region7: #{tpu_custom_call.1} parent=1 // pred_check_branch
      %12 = sbr.rel (0) target = $region9
    $region8: #{tpu_custom_call.1} parent=1 // pred_region
      _
    $region9: #{tpu_custom_call.1} parent=1 // pred_fallthru
      _
    // Predicated region
    $region10: #{tpu_custom_call.1} parent=1 // pred_check
      _
    $region11: #{tpu_custom_call.1} parent=1 // pred_check_branch
      %14 = sbr.rel (0) target = $region13
    $region12: #{tpu_custom_call.1} parent=1 // pred_region
      _
    $region13: #{tpu_custom_call.1} parent=1 // pred_fallthru
      _
    %v15 = vld [vmem:[%s0] sm:$0xff]
    %v16 = vld [vmem:[%s0 + $0x8] sm:$0xff]
    %v17 = vld [vmem:[%s0 + $0x10] sm:$0xff]
    %v18 = vld [vmem:[%s0 + $0x18] sm:$0xff]
    %v19 = vld [vmem:[%s0 + $0x20] sm:$0xff]
    %v20 = vld [vmem:[%s0 + $0x28] sm:$0xff]
    %v21 = vld [vmem:[%s0 + $0x30] sm:$0xff]
    %v22 = vld [vmem:[%s0 + $0x38] sm:$0xff]
    %v23 = vld [vmem:[%s0 + $0x40] sm:$0xff]
    %v24 = vld [vmem:[%s0 + $0x48] sm:$0xff]
    %v25 = vld [vmem:[%s0 + $0x50] sm:$0xff]
    %v26 = vld [vmem:[%s0 + $0x58] sm:$0xff]
    %v27 = vld [vmem:[%s0 + $0x60] sm:$0xff]
    %v28 = vld [vmem:[%s0 + $0x68] sm:$0xff]
    %v29 = vld [vmem:[%s0 + $0x70] sm:$0xff]
    %v30 = vld [vmem:[%s0 + $0x78] sm:$0xff]
    %v31 = vld [vmem:[%s0 + $0x80] sm:$0xff]
    %v32 = vld [vmem:[%s0 + $0x88] sm:$0xff]
    %v33 = vld [vmem:[%s0 + $0x90] sm:$0xff]
    %v34 = vld [vmem:[%s0 + $0x98] sm:$0xff]
    %v35 = vld [vmem:[%s0 + $0xa0] sm:$0xff]
    %v36 = vld [vmem:[%s0 + $0xa8] sm:$0xff]
    %v37 = vld [vmem:[%s0 + $0xb0] sm:$0xff]
    %v38 = vld [vmem:[%s0 + $0xb8] sm:$0xff]
    %v39 = vld [vmem:[%s0 + $0xc0] sm:$0xff]
    %v40 = vld [vmem:[%s0 + $0xc8] sm:$0xff]
    %v41 = vld [vmem:[%s0 + $0xd0] sm:$0xff]
    %v42 = vld [vmem:[%s0 + $0xd8] sm:$0xff]
    %v43 = vld [vmem:[%s0 + $0xe0] sm:$0xff]
    %v44 = vld [vmem:[%s0 + $0xe8] sm:$0xff]
    %v45 = vld [vmem:[%s0 + $0xf0] sm:$0xff]
    %v46 = vld [vmem:[%s0 + $0xf8] sm:$0xff]
    %v47 = vld [vmem:[%s1] sm:$0xff]
    %v48 = vld [vmem:[%s1 + $0x8] sm:$0x3]
    %v49 = vld [vmem:[%s2] sm:$0x1]
    %v51 = vperm.slane %v49, 0
    %vm53 = vcmask 80896
    %v55 = vsel %vm53, %v15, 0
    %v58 = vsel %vm53, %v16, 0
    %v61 = vsel %vm53, %v17, 0
    %v64 = vsel %vm53, %v18, 0
    %v67 = vsel %vm53, %v19, 0
    %v70 = vsel %vm53, %v20, 0
    %v73 = vsel %vm53, %v21, 0
    %v76 = vsel %vm53, %v22, 0
    %v79 = vsel %vm53, %v23, 0
    %v82 = vsel %vm53, %v24, 0
    %v85 = vsel %vm53, %v25, 0
    %v88 = vsel %vm53, %v26, 0
    %v91 = vsel %vm53, %v27, 0
    %v94 = vsel %vm53, %v28, 0
    %v97 = vsel %vm53, %v29, 0
    %v100 = vsel %vm53, %v30, 0
    %v103 = vsel %vm53, %v31, 0
    %v106 = vsel %vm53, %v32, 0
    %v109 = vsel %vm53, %v33, 0
    %v112 = vsel %vm53, %v34, 0
    %v115 = vsel %vm53, %v35, 0
    %v118 = vsel %vm53, %v36, 0
    %v121 = vsel %vm53, %v37, 0
    %v124 = vsel %vm53, %v38, 0
    %v127 = vsel %vm53, %v39, 0
    %v130 = vsel %vm53, %v40, 0
    %v133 = vsel %vm53, %v41, 0
    %v136 = vsel %vm53, %v42, 0
    %v139 = vsel %vm53, %v43, 0
    %v142 = vsel %vm53, %v44, 0
    %v145 = vsel %vm53, %v45, 0
    %v148 = vsel %vm53, %v46, 0
    %vm150 = vcmask 1041408
    %v152 = vsel %vm150, %v48, 0
    %154 = vmatpush.msra.mxu0 0.0
    %155 = vmatpush.msra.mxu0 0.0
    %156 = vmatpush.msra.mxu0 0.0
    %157 = vmatpush.msra.mxu0 0.0
    %158 = vmatpush.msra.mxu0 0.0
    %159 = vmatpush.msra.mxu0 0.0
    %160 = vmatpush.msra.mxu0 0.0
    %161 = vmatpush.msra.mxu0 0.0
    %162 = vmatpush.msra.mxu0 0.0
    %163 = vmatpush.msra.mxu0 0.0
    %164 = vmatpush.msra.mxu0 0.0
    %165 = vmatpush.msra.mxu0 0.0
    %166 = vmatpush.msra.mxu0 0.0
    %167 = vmatpush.msra.mxu0 0.0
    %168 = vmatpush.msra.mxu0 %v152
    %169 = vmatpush.msra.mxu0 %v47
    %170 = vmatmul.f32.gmra.mxu0 %v55
    %v171 = vpop.f32.mrf.mxu0
    %v172 = vadd.f32 %v51, %v171
    %173 = vmatmul.f32.gmra.mxu0 %v58
    %v174 = vpop.f32.mrf.mxu0
    %v175 = vadd.f32 %v51, %v174
    %176 = vmatmul.f32.gmra.mxu0 %v61
    %v177 = vpop.f32.mrf.mxu0
    %v178 = vadd.f32 %v51, %v177
    %179 = vmatmul.f32.gmra.mxu0 %v64
    %v180 = vpop.f32.mrf.mxu0
    %v181 = vadd.f32 %v51, %v180
    %182 = vmatmul.f32.gmra.mxu0 %v67
    %v183 = vpop.f32.mrf.mxu0
    %v184 = vadd.f32 %v51, %v183
    %185 = vmatmul.f32.gmra.mxu0 %v70
    %v186 = vpop.f32.mrf.mxu0
    %v187 = vadd.f32 %v51, %v186
    %188 = vmatmul.f32.gmra.mxu0 %v73
    %v189 = vpop.f32.mrf.mxu0
    %v190 = vadd.f32 %v51, %v189
    %191 = vmatmul.f32.gmra.mxu0 %v76
    %v192 = vpop.f32.mrf.mxu0
    %v193 = vadd.f32 %v51, %v192
    %194 = vmatmul.f32.gmra.mxu0 %v79
    %v195 = vpop.f32.mrf.mxu0
    %v196 = vadd.f32 %v51, %v195
    %197 = vmatmul.f32.gmra.mxu0 %v82
    %v198 = vpop.f32.mrf.mxu0
    %v199 = vadd.f32 %v51, %v198
    %200 = vmatmul.f32.gmra.mxu0 %v85
    %v201 = vpop.f32.mrf.mxu0
    %v202 = vadd.f32 %v51, %v201
    %203 = vmatmul.f32.gmra.mxu0 %v88
    %v204 = vpop.f32.mrf.mxu0
    %v205 = vadd.f32 %v51, %v204
    %206 = vmatmul.f32.gmra.mxu0 %v91
    %v207 = vpop.f32.mrf.mxu0
    %v208 = vadd.f32 %v51, %v207
    %209 = vmatmul.f32.gmra.mxu0 %v94
    %v210 = vpop.f32.mrf.mxu0
    %v211 = vadd.f32 %v51, %v210
    %212 = vmatmul.f32.gmra.mxu0 %v97
    %v213 = vpop.f32.mrf.mxu0
    %v214 = vadd.f32 %v51, %v213
    %215 = vmatmul.f32.gmra.mxu0 %v100
    %v216 = vpop.f32.mrf.mxu0
    %v217 = vadd.f32 %v51, %v216
    %218 = vmatmul.f32.gmra.mxu0 %v103
    %v219 = vpop.f32.mrf.mxu0
    %v220 = vadd.f32 %v51, %v219
    %221 = vmatmul.f32.gmra.mxu0 %v106
    %v222 = vpop.f32.mrf.mxu0
    %v223 = vadd.f32 %v51, %v222
    %224 = vmatmul.f32.gmra.mxu0 %v109
    %v225 = vpop.f32.mrf.mxu0
    %v226 = vadd.f32 %v51, %v225
    %227 = vmatmul.f32.gmra.mxu0 %v112
    %v228 = vpop.f32.mrf.mxu0
    %v229 = vadd.f32 %v51, %v228
    %230 = vmatmul.f32.gmra.mxu0 %v115
    %v231 = vpop.f32.mrf.mxu0
    %v232 = vadd.f32 %v51, %v231
    %233 = vmatmul.f32.gmra.mxu0 %v118
    %v234 = vpop.f32.mrf.mxu0
    %v235 = vadd.f32 %v51, %v234
    %236 = vmatmul.f32.gmra.mxu0 %v121
    %v237 = vpop.f32.mrf.mxu0
    %v238 = vadd.f32 %v51, %v237
    %239 = vmatmul.f32.gmra.mxu0 %v124
    %v240 = vpop.f32.mrf.mxu0
    %v241 = vadd.f32 %v51, %v240
    %242 = vmatmul.f32.gmra.mxu0 %v127
    %v243 = vpop.f32.mrf.mxu0
    %v244 = vadd.f32 %v51, %v243
    %245 = vmatmul.f32.gmra.mxu0 %v130
    %v246 = vpop.f32.mrf.mxu0
    %v247 = vadd.f32 %v51, %v246
    %248 = vmatmul.f32.gmra.mxu0 %v133
    %v249 = vpop.f32.mrf.mxu0
    %v250 = vadd.f32 %v51, %v249
    %251 = vmatmul.f32.gmra.mxu0 %v136
    %v252 = vpop.f32.mrf.mxu0
    %v253 = vadd.f32 %v51, %v252
    %254 = vmatmul.f32.gmra.mxu0 %v139
    %v255 = vpop.f32.mrf.mxu0
    %v256 = vadd.f32 %v51, %v255
    %257 = vmatmul.f32.gmra.mxu0 %v142
    %v258 = vpop.f32.mrf.mxu0
    %v259 = vadd.f32 %v51, %v258
    %260 = vmatmul.f32.gmra.mxu0 %v145
    %v261 = vpop.f32.mrf.mxu0
    %v262 = vadd.f32 %v51, %v261
    %263 = vmatmul.f32.gmra.mxu0 %v148
    %v264 = vpop.f32.mrf.mxu0
    %v265 = vadd.f32 %v51, %v264
    %266 = vdwg.mxu0
    %v267 = vmax.f32 %v172, 0.0
    %v268 = vmax.f32 %v175, 0.0
    %v269 = vmax.f32 %v178, 0.0
    %v270 = vmax.f32 %v181, 0.0
    %v271 = vmax.f32 %v184, 0.0
    %v272 = vmax.f32 %v187, 0.0
    %v273 = vmax.f32 %v190, 0.0
    %v274 = vmax.f32 %v193, 0.0
    %v275 = vmax.f32 %v196, 0.0
    %v276 = vmax.f32 %v199, 0.0
    %v277 = vmax.f32 %v202, 0.0
    %v278 = vmax.f32 %v205, 0.0
    %v279 = vmax.f32 %v208, 0.0
    %v280 = vmax.f32 %v211, 0.0
    %v281 = vmax.f32 %v214, 0.0
    %v282 = vmax.f32 %v217, 0.0
    %v283 = vmax.f32 %v220, 0.0
    %v284 = vmax.f32 %v223, 0.0
    %v285 = vmax.f32 %v226, 0.0
    %v286 = vmax.f32 %v229, 0.0
    %v287 = vmax.f32 %v232, 0.0
    %v288 = vmax.f32 %v235, 0.0
    %v289 = vmax.f32 %v238, 0.0
    %v290 = vmax.f32 %v241, 0.0
    %v291 = vmax.f32 %v244, 0.0
    %v292 = vmax.f32 %v247, 0.0
    %v293 = vmax.f32 %v250, 0.0
    %v294 = vmax.f32 %v253, 0.0
    %v295 = vmax.f32 %v256, 0.0
    %v296 = vmax.f32 %v259, 0.0
    %v297 = vmax.f32 %v262, 0.0
    %v298 = vmax.f32 %v265, 0.0
    %vm299 = vcmask 523264
    %v300 = vsel %vm299, %v267, -inf
    %v301 = vrot.slane %v300, 4
    %v302 = vmax.f32 %v300, %v301
    %v303 = vrot.slane %v302, 2
    %v304 = vmax.f32 %v302, %v303
    %v305 = vrot.slane %v304, 1
    %v306 = vmax.f32 %v304, %v305
    %v307 = vsel %vm299, %v268, -inf
    %v308 = vrot.slane %v307, 4
    %v309 = vmax.f32 %v307, %v308
    %v310 = vrot.slane %v309, 2
    %v311 = vmax.f32 %v309, %v310
    %v312 = vrot.slane %v311, 1
    %v313 = vmax.f32 %v311, %v312
    %v314 = vsel %vm299, %v269, -inf
    %v315 = vrot.slane %v314, 4
    %v316 = vmax.f32 %v314, %v315
    %v317 = vrot.slane %v316, 2
    %v318 = vmax.f32 %v316, %v317
    %v319 = vrot.slane %v318, 1
    %v320 = vmax.f32 %v318, %v319
    %v321 = vsel %vm299, %v270, -inf
    %v322 = vrot.slane %v321, 4
    %v323 = vmax.f32 %v321, %v322
    %v324 = vrot.slane %v323, 2
    %v325 = vmax.f32 %v323, %v324
    %v326 = vrot.slane %v325, 1
    %v327 = vmax.f32 %v325, %v326
    %v328 = vsel %vm299, %v271, -inf
    %v329 = vrot.slane %v328, 4
    %v330 = vmax.f32 %v328, %v329
    %v331 = vrot.slane %v330, 2
    %v332 = vmax.f32 %v330, %v331
    %v333 = vrot.slane %v332, 1
    %v334 = vmax.f32 %v332, %v333
    %v335 = vsel %vm299, %v272, -inf
    %v336 = vrot.slane %v335, 4
    %v337 = vmax.f32 %v335, %v336
    %v338 = vrot.slane %v337, 2
    %v339 = vmax.f32 %v337, %v338
    %v340 = vrot.slane %v339, 1
    %v341 = vmax.f32 %v339, %v340
    %v342 = vsel %vm299, %v273, -inf
    %v343 = vrot.slane %v342, 4
    %v344 = vmax.f32 %v342, %v343
    %v345 = vrot.slane %v344, 2
    %v346 = vmax.f32 %v344, %v345
    %v347 = vrot.slane %v346, 1
    %v348 = vmax.f32 %v346, %v347
    %v349 = vsel %vm299, %v274, -inf
    %v350 = vrot.slane %v349, 4
    %v351 = vmax.f32 %v349, %v350
    %v352 = vrot.slane %v351, 2
    %v353 = vmax.f32 %v351, %v352
    %v354 = vrot.slane %v353, 1
    %v355 = vmax.f32 %v353, %v354
    %v356 = vsel %vm299, %v275, -inf
    %v357 = vrot.slane %v356, 4
    %v358 = vmax.f32 %v356, %v357
    %v359 = vrot.slane %v358, 2
    %v360 = vmax.f32 %v358, %v359
    %v361 = vrot.slane %v360, 1
    %v362 = vmax.f32 %v360, %v361
    %v363 = vsel %vm299, %v276, -inf
    %v364 = vrot.slane %v363, 4
    %v365 = vmax.f32 %v363, %v364
    %v366 = vrot.slane %v365, 2
    %v367 = vmax.f32 %v365, %v366
    %v368 = vrot.slane %v367, 1
    %v369 = vmax.f32 %v367, %v368
    %v370 = vsel %vm299, %v277, -inf
    %v371 = vrot.slane %v370, 4
    %v372 = vmax.f32 %v370, %v371
    %v373 = vrot.slane %v372, 2
    %v374 = vmax.f32 %v372, %v373
    %v375 = vrot.slane %v374, 1
    %v376 = vmax.f32 %v374, %v375
    %v377 = vsel %vm299, %v278, -inf
    %v378 = vrot.slane %v377, 4
    %v379 = vmax.f32 %v377, %v378
    %v380 = vrot.slane %v379, 2
    %v381 = vmax.f32 %v379, %v380
    %v382 = vrot.slane %v381, 1
    %v383 = vmax.f32 %v381, %v382
    %v384 = vsel %vm299, %v279, -inf
    %v385 = vrot.slane %v384, 4
    %v386 = vmax.f32 %v384, %v385
    %v387 = vrot.slane %v386, 2
    %v388 = vmax.f32 %v386, %v387
    %v389 = vrot.slane %v388, 1
    %v390 = vmax.f32 %v388, %v389
    %v391 = vsel %vm299, %v280, -inf
    %v392 = vrot.slane %v391, 4
    %v393 = vmax.f32 %v391, %v392
    %v394 = vrot.slane %v393, 2
    %v395 = vmax.f32 %v393, %v394
    %v396 = vrot.slane %v395, 1
    %v397 = vmax.f32 %v395, %v396
    %v398 = vsel %vm299, %v281, -inf
    %v399 = vrot.slane %v398, 4
    %v400 = vmax.f32 %v398, %v399
    %v401 = vrot.slane %v400, 2
    %v402 = vmax.f32 %v400, %v401
    %v403 = vrot.slane %v402, 1
    %v404 = vmax.f32 %v402, %v403
    %v405 = vsel %vm299, %v282, -inf
    %v406 = vrot.slane %v405, 4
    %v407 = vmax.f32 %v405, %v406
    %v408 = vrot.slane %v407, 2
    %v409 = vmax.f32 %v407, %v408
    %v410 = vrot.slane %v409, 1
    %v411 = vmax.f32 %v409, %v410
    %v412 = vsel %vm299, %v283, -inf
    %v413 = vrot.slane %v412, 4
    %v414 = vmax.f32 %v412, %v413
    %v415 = vrot.slane %v414, 2
    %v416 = vmax.f32 %v414, %v415
    %v417 = vrot.slane %v416, 1
    %v418 = vmax.f32 %v416, %v417
    %v419 = vsel %vm299, %v284, -inf
    %v420 = vrot.slane %v419, 4
    %v421 = vmax.f32 %v419, %v420
    %v422 = vrot.slane %v421, 2
    %v423 = vmax.f32 %v421, %v422
    %v424 = vrot.slane %v423, 1
    %v425 = vmax.f32 %v423, %v424
    %v426 = vsel %vm299, %v285, -inf
    %v427 = vrot.slane %v426, 4
    %v428 = vmax.f32 %v426, %v427
    %v429 = vrot.slane %v428, 2
    %v430 = vmax.f32 %v428, %v429
    %v431 = vrot.slane %v430, 1
    %v432 = vmax.f32 %v430, %v431
    %v433 = vsel %vm299, %v286, -inf
    %v434 = vrot.slane %v433, 4
    %v435 = vmax.f32 %v433, %v434
    %v436 = vrot.slane %v435, 2
    %v437 = vmax.f32 %v435, %v436
    %v438 = vrot.slane %v437, 1
    %v439 = vmax.f32 %v437, %v438
    %v440 = vsel %vm299, %v287, -inf
    %v441 = vrot.slane %v440, 4
    %v442 = vmax.f32 %v440, %v441
    %v443 = vrot.slane %v442, 2
    %v444 = vmax.f32 %v442, %v443
    %v445 = vrot.slane %v444, 1
    %v446 = vmax.f32 %v444, %v445
    %v447 = vsel %vm299, %v288, -inf
    %v448 = vrot.slane %v447, 4
    %v449 = vmax.f32 %v447, %v448
    %v450 = vrot.slane %v449, 2
    %v451 = vmax.f32 %v449, %v450
    %v452 = vrot.slane %v451, 1
    %v453 = vmax.f32 %v451, %v452
    %v454 = vsel %vm299, %v289, -inf
    %v455 = vrot.slane %v454, 4
    %v456 = vmax.f32 %v454, %v455
    %v457 = vrot.slane %v456, 2
    %v458 = vmax.f32 %v456, %v457
    %v459 = vrot.slane %v458, 1
    %v460 = vmax.f32 %v458, %v459
    %v461 = vsel %vm299, %v290, -inf
    %v462 = vrot.slane %v461, 4
    %v463 = vmax.f32 %v461, %v462
    %v464 = vrot.slane %v463, 2
    %v465 = vmax.f32 %v463, %v464
    %v466 = vrot.slane %v465, 1
    %v467 = vmax.f32 %v465, %v466
    %v468 = vsel %vm299, %v291, -inf
    %v469 = vrot.slane %v468, 4
    %v470 = vmax.f32 %v468, %v469
    %v471 = vrot.slane %v470, 2
    %v472 = vmax.f32 %v470, %v471
    %v473 = vrot.slane %v472, 1
    %v474 = vmax.f32 %v472, %v473
    %v475 = vsel %vm299, %v292, -inf
    %v476 = vrot.slane %v475, 4
    %v477 = vmax.f32 %v475, %v476
    %v478 = vrot.slane %v477, 2
    %v479 = vmax.f32 %v477, %v478
    %v480 = vrot.slane %v479, 1
    %v481 = vmax.f32 %v479, %v480
    %v482 = vsel %vm299, %v293, -inf
    %v483 = vrot.slane %v482, 4
    %v484 = vmax.f32 %v482, %v483
    %v485 = vrot.slane %v484, 2
    %v486 = vmax.f32 %v484, %v485
    %v487 = vrot.slane %v486, 1
    %v488 = vmax.f32 %v486, %v487
    %v489 = vsel %vm299, %v294, -inf
    %v490 = vrot.slane %v489, 4
    %v491 = vmax.f32 %v489, %v490
    %v492 = vrot.slane %v491, 2
    %v493 = vmax.f32 %v491, %v492
    %v494 = vrot.slane %v493, 1
    %v495 = vmax.f32 %v493, %v494
    %v496 = vsel %vm299, %v295, -inf
    %v497 = vrot.slane %v496, 4
    %v498 = vmax.f32 %v496, %v497
    %v499 = vrot.slane %v498, 2
    %v500 = vmax.f32 %v498, %v499
    %v501 = vrot.slane %v500, 1
    %v502 = vmax.f32 %v500, %v501
    %v503 = vsel %vm299, %v296, -inf
    %v504 = vrot.slane %v503, 4
    %v505 = vmax.f32 %v503, %v504
    %v506 = vrot.slane %v505, 2
    %v507 = vmax.f32 %v505, %v506
    %v508 = vrot.slane %v507, 1
    %v509 = vmax.f32 %v507, %v508
    %v510 = vsel %vm299, %v297, -inf
    %v511 = vrot.slane %v510, 4
    %v512 = vmax.f32 %v510, %v511
    %v513 = vrot.slane %v512, 2
    %v514 = vmax.f32 %v512, %v513
    %v515 = vrot.slane %v514, 1
    %v516 = vmax.f32 %v514, %v515
    %v517 = vsel %vm299, %v298, -inf
    %v518 = vrot.slane %v517, 4
    %v519 = vmax.f32 %v517, %v518
    %v520 = vrot.slane %v519, 2
    %v521 = vmax.f32 %v519, %v520
    %v522 = vrot.slane %v521, 1
    %v523 = vmax.f32 %v521, %v522
    %v524 = vpack.c.bf16 %v306, %v306
    %v525 = vpack.c.bf16 %v313, %v313
    %v526 = vpack.c.bf16 %v320, %v320
    %v527 = vpack.c.bf16 %v327, %v327
    %v528 = vpack.c.bf16 %v334, %v334
    %v529 = vpack.c.bf16 %v341, %v341
    %v530 = vpack.c.bf16 %v348, %v348
    %v531 = vpack.c.bf16 %v355, %v355
    %v532 = vpack.c.bf16 %v362, %v362
    %v533 = vpack.c.bf16 %v369, %v369
    %v534 = vpack.c.bf16 %v376, %v376
    %v535 = vpack.c.bf16 %v383, %v383
    %v536 = vpack.c.bf16 %v390, %v390
    %v537 = vpack.c.bf16 %v397, %v397
    %v538 = vpack.c.bf16 %v404, %v404
    %v539 = vpack.c.bf16 %v411, %v411
    %v540 = vpack.c.bf16 %v418, %v418
    %v541 = vpack.c.bf16 %v425, %v425
    %v542 = vpack.c.bf16 %v432, %v432
    %v543 = vpack.c.bf16 %v439, %v439
    %v544 = vpack.c.bf16 %v446, %v446
    %v545 = vpack.c.bf16 %v453, %v453
    %v546 = vpack.c.bf16 %v460, %v460
    %v547 = vpack.c.bf16 %v467, %v467
    %v548 = vpack.c.bf16 %v474, %v474
    %v549 = vpack.c.bf16 %v481, %v481
    %v550 = vpack.c.bf16 %v488, %v488
    %v551 = vpack.c.bf16 %v495, %v495
    %v552 = vpack.c.bf16 %v502, %v502
    %v553 = vpack.c.bf16 %v509, %v509
    %v554 = vpack.c.bf16 %v516, %v516
    %v555 = vpack.c.bf16 %v523, %v523
    %v588 = vunpack.c.l.b16 %v524
    %v589 = vunpack.c.l.b16 %v525
    %v590 = vunpack.c.l.b16 %v526
    %v591 = vunpack.c.l.b16 %v527
    %v592 = vunpack.c.l.b16 %v528
    %v593 = vunpack.c.l.b16 %v529
    %v594 = vunpack.c.l.b16 %v530
    %v595 = vunpack.c.l.b16 %v531
    %v596 = vunpack.c.l.b16 %v532
    %v597 = vunpack.c.l.b16 %v533
    %v598 = vunpack.c.l.b16 %v534
    %v599 = vunpack.c.l.b16 %v535
    %v600 = vunpack.c.l.b16 %v536
    %v601 = vunpack.c.l.b16 %v537
    %v602 = vunpack.c.l.b16 %v538
    %v603 = vunpack.c.l.b16 %v539
    %v604 = vunpack.c.l.b16 %v540
    %v605 = vunpack.c.l.b16 %v541
    %v606 = vunpack.c.l.b16 %v542
    %v607 = vunpack.c.l.b16 %v543
    %v608 = vunpack.c.l.b16 %v544
    %v609 = vunpack.c.l.b16 %v545
    %v610 = vunpack.c.l.b16 %v546
    %v611 = vunpack.c.l.b16 %v547
    %v612 = vunpack.c.l.b16 %v548
    %v613 = vunpack.c.l.b16 %v549
    %v614 = vunpack.c.l.b16 %v550
    %v615 = vunpack.c.l.b16 %v551
    %v616 = vunpack.c.l.b16 %v552
    %v617 = vunpack.c.l.b16 %v553
    %v618 = vunpack.c.l.b16 %v554
    %v619 = vunpack.c.l.b16 %v555
    %vm620 = vcmask 1041409
    %v621 = vsel %vm620, %v589, %v588
    %vm622 = vcmask 1042434
    %v623 = vsel %vm622, %v590, %v621
    %vm624 = vcmask 1043459
    %v625 = vsel %vm624, %v591, %v623
    %vm626 = vcmask 1044484
    %v627 = vsel %vm626, %v592, %v625
    %vm628 = vcmask 1045509
    %v629 = vsel %vm628, %v593, %v627
    %vm630 = vcmask 1046534
    %v631 = vsel %vm630, %v594, %v629
    %vm632 = vcmask 1047559
    %v633 = vsel %vm632, %v595, %v631
    %v634 = vsel %vm620, %v597, %v596
    %v635 = vsel %vm622, %v598, %v634
    %v636 = vsel %vm624, %v599, %v635
    %v637 = vsel %vm626, %v600, %v636
    %v638 = vsel %vm628, %v601, %v637
    %v639 = vsel %vm630, %v602, %v638
    %v640 = vsel %vm632, %v603, %v639
    %v641 = vsel %vm620, %v605, %v604
    %v642 = vsel %vm622, %v606, %v641
    %v643 = vsel %vm624, %v607, %v642
    %v644 = vsel %vm626, %v608, %v643
    %v645 = vsel %vm628, %v609, %v644
    %v646 = vsel %vm630, %v610, %v645
    %v647 = vsel %vm632, %v611, %v646
    %v648 = vsel %vm620, %v613, %v612
    %v649 = vsel %vm622, %v614, %v648
    %v650 = vsel %vm624, %v615, %v649
    %v651 = vsel %vm626, %v616, %v650
    %v652 = vsel %vm628, %v617, %v651
    %v653 = vsel %vm630, %v618, %v652
    %v654 = vsel %vm632, %v619, %v653
    %v655 = vpack.c.b16 %v633, %v633
    %v656 = vpack.c.b16 %v640, %v640
    %v657 = vpack.c.b16 %v647, %v647
    %v658 = vpack.c.b16 %v654, %v654
    %vm663 = vcmask 519168
    %664 = vst.msk [vmem:[#allocation2] sm:$0xf] %vm663, %v655
    %665 = vst.msk [vmem:[#allocation2 + $0x4] sm:$0xf] %vm663, %v656
    %666 = vst.msk [vmem:[#allocation2 + $0x8] sm:$0xf] %vm663, %v657
    %667 = vst.msk [vmem:[#allocation2 + $0xc] sm:$0xf] %vm663, %v658
    // Predicated region
    $region14: #{tpu_custom_call.1} parent=1 // pred_check
      _
    $region15: #{tpu_custom_call.1} parent=1 // pred_check_branch
      %669 = sbr.rel (0) target = $region17
    $region16: #{tpu_custom_call.1} parent=1 // pred_region
      %671 = vsyncadd [#allocation3], 0
      %s672 = sshll.u32 [#allocation2], 4
      %s673 = int_to_ptr.vmem [resolvable:$true] %s672
      %s674 = sshll.u32 %s3, 4
      %s675 = int_to_ptr.hbm [resolvable:$true] %s674
      %680 = dma.vmem_to_hbm [thread:$0]  %s673, 256, %s675, [#allocation3], 64, 64, 4
    $region17: #{tpu_custom_call.1} parent=1 // pred_fallthru
      _
    // Predicated region
    $region18: #{tpu_custom_call.1} parent=1 // pred_check
      _
    $region19: #{tpu_custom_call.1} parent=1 // pred_check_branch
      %682 = sbr.rel (0) target = $region21
    $region20: #{tpu_custom_call.1} parent=1 // pred_region
      %684 = dma.done [#allocation3], 256
    $region21: #{tpu_custom_call.1} parent=1 // pred_fallthru
      _
    %685 = vsyncpa [#allocation3], 1

</llo_original>
